<compile_context>
chip_gen: v7x
topology: tpu7x:2x2x1
jax: 0.10.0
libtpu: 0.0.40
codegen_flags: <defaults>
</compile_context>

<pallas_src>
import jax
import jax.numpy as jnp
from jax.experimental import pallas as pl
from jax.experimental.pallas import tpu as pltpu


def _downsample1d_kernel(even_ref, odd_ref, bound_ref, w_ref, b_ref, o_ref):
    """One (batch, Lout-tile) block of Conv1d(C, C, k=3, stride=2, pad=1).

    even_ref : (1, C, T)     x[:, 2j]        -> tap k=1
    odd_ref  : (1, C, T)     x[:, 2j + 1]    -> tap k=2
    bound_ref: (1, 1, C, 1)  x[:, 2*j0 - 1]  (left neighbour of this tile;
                             zeros for the first tile) -> tap k=0, column 0
    w_ref    : (3, C, C)     conv taps, w_ref[k] = weight[:, :, k]
    b_ref    : (C, 1)        bias (f32)
    o_ref    : (1, C, T)     output tile
    """
    T = o_ref.shape[2]

    even = even_ref[0]                       # (C, T)
    odd = odd_ref[0]                         # (C, T)

    # Tap k=0 column j is x[:, 2*(j0 + j) - 1] == odd[:, j - 1] for j >= 1.
    # One XLU rotate; column 0 is patched from the boundary input with a
    # single lane-0 select (no MXU work, no f32 round trip).
    prev = pltpu.roll(odd, shift=1, axis=1)
    lane0 = jax.lax.broadcasted_iota(jnp.int32, (1, T), 1) == 0
    prev = jnp.where(lane0, bound_ref[0, 0], prev)

    # out[:, j] = W0 @ x[:, 2j-1] + W1 @ x[:, 2j] + W2 @ x[:, 2j+1] + bias
    acc = jnp.dot(w_ref[0], prev, preferred_element_type=jnp.float32)
    acc = acc + jnp.dot(w_ref[1], even, preferred_element_type=jnp.float32)
    acc = acc + jnp.dot(w_ref[2], odd, preferred_element_type=jnp.float32)
    o_ref[0] = (acc + b_ref[...]).astype(o_ref.dtype)


def _const_spec(block_shape, index_map):
    # Constant-index operands (weights / bias) only need a single VMEM buffer.
    # Fall back to default double buffering if this Pallas version rejects it.
    try:
        return pl.BlockSpec(block_shape, index_map, pipeline_mode=pl.Buffered(1))
    except Exception:
        return pl.BlockSpec(block_shape, index_map)


def downsample1d(x, weight, bias, *, max_tile=2048):
    """Conv1d(dim, dim, kernel_size=3, stride=2, padding=1) in NCL layout.

    x: (B, C, L), weight: (C, C, 3), bias: (C,).  Returns (B, C, Lout) with
    Lout = (L - 1) // 2 + 1.
    """
    B, C, L = x.shape
    Lout = (L - 1) // 2 + 1

    LANE = 128
    itemsize = jnp.dtype(x.dtype).itemsize
    if Lout <= LANE:
        T = Lout                               # single full-extent tile
    else:
        # Lane-dense tile (multiple of 128).  Budget the streaming buffers
        # (even + odd + out, double-buffered) to ~20 MiB so even C=1024 f32
        # stays inside v7x's 64 MiB VMEM; on v5e/v6e (128 MiB) small C simply
        # gets big tiles (up to max_tile) to amortize per-step overhead.
        budget = 20 * 1024 * 1024
        t_cap = max(LANE, budget // (6 * C * itemsize))
        T = min(max_tile, Lout, t_cap)
        T = max(LANE, (T // LANE) * LANE)
    nt = pl.cdiv(Lout, T)
    Lp = nt * T

    # Single fused host pass over x: zero-pad (conv right edge + tile padding)
    # and de-interleave into the two stride-2 phases the kernel streams.
    xp = jnp.pad(x, ((0, 0), (0, 0), (0, 2 * Lp - L)))
    even = xp[:, :, 0::2]                      # (B, C, Lp): x[:, 2j]      tap k=1
    odd = xp[:, :, 1::2]                       # (B, C, Lp): x[:, 2j + 1]  tap k=2

    # Per-tile left boundary column x[:, 2*t*T - 1] (tap k=0 of the tile's
    # first output); zeros for t == 0.  Tiny (B*C*nt elements), so no carry
    # scratch is needed and both grid axes stay independent ("parallel").
    if nt > 1:
        inner = odd[:, :, T - 1:(nt - 1) * T:T]              # (B, C, nt-1)
        bound = jnp.concatenate(
            [jnp.zeros((B, C, 1), x.dtype), inner], axis=2)  # (B, C, nt)
    else:
        bound = jnp.zeros((B, C, 1), x.dtype)
    bound = jnp.transpose(bound, (0, 2, 1))[..., None]       # (B, nt, C, 1)

    w_all = jnp.transpose(weight, (2, 0, 1))                 # (3, C, C)
    b2d = bias.reshape(C, 1).astype(jnp.float32)

    x_spec = pl.BlockSpec((1, C, T), lambda b, t: (b, 0, t))
    bound_spec = pl.BlockSpec((1, 1, C, 1), lambda b, t: (b, t, 0, 0))
    w_spec = _const_spec((3, C, C), lambda b, t: (0, 0, 0))   # DMA'd once
    b_spec = _const_spec((C, 1), lambda b, t: (0, 0))         # DMA'd once
    o_spec = pl.BlockSpec((1, C, T), lambda b, t: (b, 0, t))

    out = pl.pallas_call(
        _downsample1d_kernel,
        out_shape=jax.ShapeDtypeStruct((B, C, Lp), x.dtype),
        grid_spec=pltpu.PrefetchScalarGridSpec(
            num_scalar_prefetch=0,
            grid=(B, nt),
            in_specs=[x_spec, x_spec, bound_spec, w_spec, b_spec],
            out_specs=o_spec,
        ),
        compiler_params=pltpu.CompilerParams(
            # No cross-step dependencies remain -> both axes shardable across
            # TensorCores (v7x megacore); harmless on single-TC v5e/v6e.
            dimension_semantics=("parallel", "parallel"),
            vmem_limit_bytes=48 * 1024 * 1024),
    )(even, odd, bound, w_all, b2d)

    if Lp != Lout:
        out = out[:, :, :Lout]
    return out


def _reference_conv1d(x, weight, bias):
    # Conv1d(dim, dim, 3, stride=2, padding=1) reference in NCL layout.
    out = jax.lax.conv_general_dilated(
        x, weight,
        window_strides=(2,),
        padding=((1, 1),),
        dimension_numbers=("NCH", "OIH", "NCH"),
    )
    return out + bias.reshape(1, -1, 1)


if __name__ == "__main__":
    key = jax.random.PRNGKey(0)
    k_x, k_w, k_b, k_x2 = jax.random.split(key, 4)

    B, C, L = 2, 4, 16  # dim = C = 4
    fan_in = C * 3
    bound = 1.0 / (fan_in ** 0.5)
    weight = jax.random.uniform(k_w, (C, C, 3), jnp.float32, -bound, bound)
    bias = jax.random.uniform(k_b, (C,), jnp.float32, -bound, bound)

    # Small demo shape (single tile, Lout < 128).
    x = jax.random.normal(k_x, (B, C, L), dtype=jnp.float32)
    out = jax.block_until_ready(downsample1d(x, weight, bias))
    ref = _reference_conv1d(x, weight, bias)
    assert out.shape == (B, C, (L - 1) // 2 + 1)
    assert jnp.allclose(out, ref, atol=1e-5, rtol=1e-5)

    # Multi-tile path: exercises lane-dense 128-wide tiles and the per-tile
    # boundary-column input (replacement for the old cross-tile carry).
    L2 = 512
    x2 = jax.random.normal(k_x2, (B, C, L2), dtype=jnp.float32)
    out2 = jax.block_until_ready(downsample1d(x2, weight, bias, max_tile=128))
    ref2 = _reference_conv1d(x2, weight, bias)
    assert out2.shape == (B, C, (L2 - 1) // 2 + 1)
    assert jnp.allclose(out2, ref2, atol=1e-5, rtol=1e-5)

    print("KERNEL_OK")
</pallas_src>

<mosaic_0001>
module attributes {stable_mosaic.version = 11 : i64} {
  func.func @_downsample1d_kernel(%arg0: i32, %arg1: i32, %arg2: memref<1x4x8xf32, #tpu.memory_space<vmem>>, %arg3: memref<1x4x8xf32, #tpu.memory_space<vmem>>, %arg4: memref<1x1x4x1xf32, #tpu.memory_space<vmem>>, %arg5: memref<3x4x4xf32, #tpu.memory_space<vmem>>, %arg6: memref<4x1xf32, #tpu.memory_space<vmem>>, %arg7: memref<1x4x8xf32, #tpu.memory_space<vmem>>) attributes {dimension_semantics = [#tpu.dimension_semantics<parallel>, #tpu.dimension_semantics<parallel>], iteration_bounds = array<i64: 2, 1>, scalar_prefetch = 0 : i64, scratch_operands = 0 : i64, tpu.core_type = #tpu.core_type<tc>, window_params = [{transform_indices = @transform_0, window_bounds = array<i64: 1, 4, 8>}, {transform_indices = @transform_1, window_bounds = array<i64: 1, 4, 8>}, {transform_indices = @transform_2, window_bounds = array<i64: 1, 1, 4, 1>}, {pipeline_mode = #tpu.pipeline_mode<synchronous>, transform_indices = @transform_3, window_bounds = array<i64: 3, 4, 4>}, {pipeline_mode = #tpu.pipeline_mode<synchronous>, transform_indices = @transform_4, window_bounds = array<i64: 4, 1>}, {transform_indices = @transform_5, window_bounds = array<i64: 1, 4, 8>}]} {
    %c0 = arith.constant 0 : index
    %c0_0 = arith.constant 0 : index
    %c0_1 = arith.constant 0 : index
    %0 = vector.load %arg2[%c0, %c0_0, %c0_1] : memref<1x4x8xf32, #tpu.memory_space<vmem>>, vector<1x4x8xf32>
    %1 = vector.shape_cast %0 : vector<1x4x8xf32> to vector<4x8xf32>
    %c0_2 = arith.constant 0 : index
    %c0_3 = arith.constant 0 : index
    %c0_4 = arith.constant 0 : index
    %2 = vector.load %arg3[%c0_2, %c0_3, %c0_4] : memref<1x4x8xf32, #tpu.memory_space<vmem>>, vector<1x4x8xf32>
    %3 = vector.shape_cast %2 : vector<1x4x8xf32> to vector<4x8xf32>
    %c1_i32 = arith.constant 1 : i32
    %4 = tpu.dynamic_rotate %3 by %c1_i32 dim 1 : vector<4x8xf32>, i32 -> vector<4x8xf32>
    %5 = tpu.iota {dimensions = array<i32: 1>} : vector<1x8xi32>
    %c0_i32 = arith.constant 0 : i32
    %6 = vector.broadcast %c0_i32 : i32 to vector<1x8xi32>
    %7 = arith.cmpi eq, %5, %6 : vector<1x8xi32>
    %c0_5 = arith.constant 0 : index
    %c0_6 = arith.constant 0 : index
    %c0_7 = arith.constant 0 : index
    %c0_8 = arith.constant 0 : index
    %8 = vector.load %arg4[%c0_5, %c0_6, %c0_7, %c0_8] : memref<1x1x4x1xf32, #tpu.memory_space<vmem>>, vector<1x1x4x1xf32>
    %9 = vector.shape_cast %8 : vector<1x1x4x1xf32> to vector<4x1xf32>
    %10 = vector.shape_cast %7 : vector<1x8xi1> to vector<1x8xi1>
    %11 = vector.broadcast %10 : vector<1x8xi1> to vector<4x8xi1>
    %12 = vector.shape_cast %9 : vector<4x1xf32> to vector<4x1xf32>
    %13 = vector.broadcast %12 : vector<4x1xf32> to vector<4x8xf32>
    %14 = arith.select %11, %13, %4 : vector<4x8xi1>, vector<4x8xf32>
    %c0_9 = arith.constant 0 : index
    %c0_10 = arith.constant 0 : index
    %c0_11 = arith.constant 0 : index
    %15 = vector.load %arg5[%c0_9, %c0_10, %c0_11] : memref<3x4x4xf32, #tpu.memory_space<vmem>>, vector<1x4x4xf32>
    %16 = vector.shape_cast %15 : vector<1x4x4xf32> to vector<4x4xf32>
    %cst = arith.constant dense<0.000000e+00> : vector<4x8xf32>
    %17 = tpu.matmul %16, %14, %cst {dimension_numbers = #tpu.dot_dimension_numbers<[1], [0], [0], [1], [0, 0, 1, 1], [], []>} : vector<4x4xf32>, vector<4x8xf32>, vector<4x8xf32> -> vector<4x8xf32>
    %c1 = arith.constant 1 : index
    %c0_12 = arith.constant 0 : index
    %c0_13 = arith.constant 0 : index
    %18 = vector.load %arg5[%c1, %c0_12, %c0_13] : memref<3x4x4xf32, #tpu.memory_space<vmem>>, vector<1x4x4xf32>
    %19 = vector.shape_cast %18 : vector<1x4x4xf32> to vector<4x4xf32>
    %cst_14 = arith.constant dense<0.000000e+00> : vector<4x8xf32>
    %20 = tpu.matmul %19, %1, %cst_14 {dimension_numbers = #tpu.dot_dimension_numbers<[1], [0], [0], [1], [0, 0, 1, 1], [], []>} : vector<4x4xf32>, vector<4x8xf32>, vector<4x8xf32> -> vector<4x8xf32>
    %21 = arith.addf %17, %20 : vector<4x8xf32>
    %c2 = arith.constant 2 : index
    %c0_15 = arith.constant 0 : index
    %c0_16 = arith.constant 0 : index
    %22 = vector.load %arg5[%c2, %c0_15, %c0_16] : memref<3x4x4xf32, #tpu.memory_space<vmem>>, vector<1x4x4xf32>
    %23 = vector.shape_cast %22 : vector<1x4x4xf32> to vector<4x4xf32>
    %cst_17 = arith.constant dense<0.000000e+00> : vector<4x8xf32>
    %24 = tpu.matmul %23, %3, %cst_17 {dimension_numbers = #tpu.dot_dimension_numbers<[1], [0], [0], [1], [0, 0, 1, 1], [], []>} : vector<4x4xf32>, vector<4x8xf32>, vector<4x8xf32> -> vector<4x8xf32>
    %25 = arith.addf %21, %24 : vector<4x8xf32>
    %c0_18 = arith.constant 0 : index
    %c0_19 = arith.constant 0 : index
    %26 = vector.load %arg6[%c0_18, %c0_19] : memref<4x1xf32, #tpu.memory_space<vmem>>, vector<4x1xf32>
    %27 = vector.broadcast %26 : vector<4x1xf32> to vector<4x8xf32>
    %28 = arith.addf %25, %27 : vector<4x8xf32>
    %c0_20 = arith.constant 0 : index
    %c0_21 = arith.constant 0 : index
    %c0_22 = arith.constant 0 : index
    %29 = vector.load %arg7[%c0_20, %c0_21, %c0_22] : memref<1x4x8xf32, #tpu.memory_space<vmem>>, vector<1x4x8xf32>
    %30 = vector.shape_cast %29 : vector<1x4x8xf32> to vector<4x8xf32>
    %31 = vector.shape_cast %28 : vector<4x8xf32> to vector<1x4x8xf32>
    tpu.vector_store %arg7[%c0_20, %c0_21, %c0_22], %31 {strides = array<i32>} : memref<1x4x8xf32, #tpu.memory_space<vmem>>, vector<1x4x8xf32>,
    return
  }
  func.func @transform_0(%arg0: i32, %arg1: i32) -> (i32, i32, i32) {
    %c0_i32 = arith.constant 0 : i32
    %c0_i32_0 = arith.constant 0 : i32
    return %arg0, %c0_i32, %arg1 : i32, i32, i32
  }
  func.func @transform_1(%arg0: i32, %arg1: i32) -> (i32, i32, i32) {
    %c0_i32 = arith.constant 0 : i32
    %c0_i32_0 = arith.constant 0 : i32
    return %arg0, %c0_i32, %arg1 : i32, i32, i32
  }
  func.func @transform_2(%arg0: i32, %arg1: i32) -> (i32, i32, i32, i32) {
    %c0_i32 = arith.constant 0 : i32
    %c0_i32_0 = arith.constant 0 : i32
    %c0_i32_1 = arith.constant 0 : i32
    return %arg0, %arg1, %c0_i32, %c0_i32_0 : i32, i32, i32, i32
  }
  func.func @transform_3(%arg0: i32, %arg1: i32) -> (i32, i32, i32) {
    %c0_i32 = arith.constant 0 : i32
    %c0_i32_0 = arith.constant 0 : i32
    %c0_i32_1 = arith.constant 0 : i32
    %c0_i32_2 = arith.constant 0 : i32
    return %c0_i32, %c0_i32_0, %c0_i32_1 : i32, i32, i32
  }
  func.func @transform_4(%arg0: i32, %arg1: i32) -> (i32, i32) {
    %c0_i32 = arith.constant 0 : i32
    %c0_i32_0 = arith.constant 0 : i32
    %c0_i32_1 = arith.constant 0 : i32
    return %c0_i32, %c0_i32_0 : i32, i32
  }
  func.func @transform_5(%arg0: i32, %arg1: i32) -> (i32, i32, i32) {
    %c0_i32 = arith.constant 0 : i32
    %c0_i32_0 = arith.constant 0 : i32
    return %arg0, %c0_i32, %arg1 : i32, i32, i32
  }
}

</mosaic_0001>

<llo_original>
// kernel: tpu_custom_call.1
$region0: #{tpu_custom_call.1}
  #allocation0 [shape = 'u32[]', space=smem, size = 0x4, offset = 0x4, fixed_abs, tag = 'smem constant byte address 0x4 - core index']
  #allocation1 [shape = 'u32[144,128]{1,0:T(1,128)}', space=vmem, size = 0x12000, scoped, tag = 'internal scratch']
  %s0 = inlined_call_operand.vmem [shape: f32[2,4,8], index: 0, kind: input, shape index: {}]
  %s1 = inlined_call_operand.hbm [shape: f32[2,4,8], index: 1, kind: input, shape index: {}]
  %s2 = inlined_call_operand.vmem [shape: f32[2,1,4,1], index: 2, kind: input, shape index: {}]
  %s3 = inlined_call_operand.vmem [shape: f32[3,4,4], index: 3, kind: input, shape index: {}]
  %s4 = inlined_call_operand.vmem [shape: f32[4,1], index: 4, kind: input, shape index: {}]
  %s5 = inlined_call_operand.hbm [shape: f32[2,4,8], index: 5, kind: output, shape index: {}]
  %s6 = sld [smem:[#allocation0]]
  $region57: #{tpu_custom_call.1} parent=0
    _
  %s8 = ssub.s32 1, %s6
  %s9 = scalar_select 0, %s8, %s6
  $region1: #{tpu_custom_call.1} parent=0
    #allocation2 [shape = 'u8[4096]{0}', space=vmem, size = 0x1000, scoped, tag = 'input window, operand 1']
    #allocation3 [shape = 's32[2]{0}', space=sflag, size = 0x8, scoped, tag = 'scoped memory for tpu_custom_call.1']
    #allocation4 [shape = 's32[2]{0}', space=sflag, size = 0x8, scoped, tag = 'scoped memory for tpu_custom_call.1']
    #allocation5 [shape = 'u8[4096]{0}', space=vmem, size = 0x1000, scoped, tag = 'output window, operand 0']
    %10 = vsyncpa [#allocation3], 0
    %s11 = scalar_lea.sflag [#allocation3], 1
    %12 = vsyncpa %s11, 0
    %13 = vsyncpa [#allocation4], 0
    %s14 = scalar_lea.sflag [#allocation4], 1
    %15 = vsyncpa %s14, 0
    loop: start=0, step=1, limit=4
    $region2: #{tpu_custom_call.1} parent=1 // loop_pre_header
      _
    $region3: #{tpu_custom_call.1} parent=1 // loop_header
      %s17 = sphi 0, %s21
      %p18 = scmp.ge.s32.totalorder %s17, 4
      %s24 = sphi 0, %s36
      %s25 = sphi 0, %s32
      %s26 = sphi 0, %s24
      %s27 = sphi 0, %s25
      %s28 = sphi 0, %s26
      %s29 = sphi 0, %s27
      %s41 = sphi 0, %s43
      %s44 = sphi 0, %s41
      %s45 = sphi 0, %s44
      %s61 = sphi 0, %s45
      %s69 = sphi 0, %s71
      %s72 = sphi 0, %s69
      %s73 = sphi 0, %s72
      %s89 = sphi 0, %s73
      %s97 = sphi 0, %s99
      %s100 = sphi 0, %s97
      %s101 = sphi 0, %s100
      %s117 = sphi 0, %s101
      %s121 = sphi 0, %s121
      %s123 = sphi 0, %s121
      %s124 = sphi 0, %s123
      %s138 = sphi 0, %s124
      %s142 = sphi 0, %s142
      %s144 = sphi 0, %s142
      %s145 = sphi 0, %s144
      %s159 = sphi 0, %s145
      %s167 = sphi 0, %s169
      %s170 = sphi 0, %s167
      %s171 = sphi 0, %s170
      %s187 = sphi 0, %s171
    $region4: #{tpu_custom_call.1} parent=1 // loop_header_branch
      %20 = sbr.rel (%p18) target = $region8
    $region5: #{tpu_custom_call.1} parent=1 // loop_body
      %s22 = ssub.s32 %s17, 1
      %s23 = ssub.s32 %s17, 2
      %s30 = sadd.s32 1, %s25
      %p31 = scmp.ge.s32.totalorder %s30, 1
      %s32 = scalar_select %p31, 0, %s30
      %s33 = sadd.s32 1, %s24
      %s34 = scalar_select %p31, %s33, %s24
      %p35 = scmp.ge.s32.totalorder %s34, 2
      %s36 = scalar_select %p35, 0, %s34
      %s37 = ssub.s32 %s24, %s36
      %s38 = ssub.s32 %s25, %s32
      %s39 = sor.u32 %s37, %s38
      %p40 = scmp.eq.s32.totalorder %s39, 0
      %s42 = sadd.s32 %s41, 1
      %s43 = scalar_select %p40, %s41, %s42
      %p46 = pneg %p40
      %p47 = scmp.eq.s32.totalorder %s17, 1
      %p48 = por %p46, %p47
      %p49 = scmp.ne.s32.totalorder %s41, %s44
      %p50 = scmp.eq.s32.totalorder %s17, 0
      %p51 = por %p49, %p50
      %p52 = scmp.ne.s32.totalorder %s41, %s44
      %p53 = scmp.eq.s32.totalorder %s22, 1
      %p54 = por %p52, %p53
      %p55 = scmp.ne.s32.totalorder %s44, %s45
      %p56 = scmp.eq.s32.totalorder %s22, 0
      %p57 = por %p55, %p56
      %p58 = scmp.ne.s32.totalorder %s44, %s45
      %p59 = scmp.eq.s32.totalorder %s23, 1
      %p60 = por %p58, %p59
      %p62 = scmp.ne.s32.totalorder %s45, %s61
      %p63 = scmp.eq.s32.totalorder %s23, 0
      %p64 = por %p62, %p63
      %s65 = ssub.s32 %s24, %s36
      %s66 = ssub.s32 %s25, %s32
      %s67 = sor.u32 %s65, %s66
      %p68 = scmp.eq.s32.totalorder %s67, 0
      %s70 = sadd.s32 %s69, 1
      %s71 = scalar_select %p68, %s69, %s70
      %p74 = pneg %p68
      %p75 = scmp.eq.s32.totalorder %s17, 1
      %p76 = por %p74, %p75
      %p77 = scmp.ne.s32.totalorder %s69, %s72
      %p78 = scmp.eq.s32.totalorder %s17, 0
      %p79 = por %p77, %p78
      %p80 = scmp.ne.s32.totalorder %s69, %s72
      %p81 = scmp.eq.s32.totalorder %s22, 1
      %p82 = por %p80, %p81
      %p83 = scmp.ne.s32.totalorder %s72, %s73
      %p84 = scmp.eq.s32.totalorder %s22, 0
      %p85 = por %p83, %p84
      %p86 = scmp.ne.s32.totalorder %s72, %s73
      %p87 = scmp.eq.s32.totalorder %s23, 1
      %p88 = por %p86, %p87
      %p90 = scmp.ne.s32.totalorder %s73, %s89
      %p91 = scmp.eq.s32.totalorder %s23, 0
      %p92 = por %p90, %p91
      %s93 = ssub.s32 %s24, %s36
      %s94 = ssub.s32 %s25, %s32
      %s95 = sor.u32 %s93, %s94
      %p96 = scmp.eq.s32.totalorder %s95, 0
      %s98 = sadd.s32 %s97, 1
      %s99 = scalar_select %p96, %s97, %s98
      %p102 = pneg %p96
      %p103 = scmp.eq.s32.totalorder %s17, 1
      %p104 = por %p102, %p103
      %p105 = scmp.ne.s32.totalorder %s97, %s100
      %p106 = scmp.eq.s32.totalorder %s17, 0
      %p107 = por %p105, %p106
      %p108 = scmp.ne.s32.totalorder %s97, %s100
      %p109 = scmp.eq.s32.totalorder %s22, 1
      %p110 = por %p108, %p109
      %p111 = scmp.ne.s32.totalorder %s100, %s101
      %p112 = scmp.eq.s32.totalorder %s22, 0
      %p113 = por %p111, %p112
      %p114 = scmp.ne.s32.totalorder %s100, %s101
      %p115 = scmp.eq.s32.totalorder %s23, 1
      %p116 = por %p114, %p115
      %p118 = scmp.ne.s32.totalorder %s101, %s117
      %p119 = scmp.eq.s32.totalorder %s23, 0
      %p120 = por %p118, %p119
      %s122 = sadd.s32 %s121, 1
      %p125 = scmp.eq.s32.totalorder %s17, 1
      %p126 = scmp.ne.s32.totalorder %s121, %s123
      %p127 = scmp.eq.s32.totalorder %s17, 0
      %p128 = por %p126, %p127
      %p129 = scmp.ne.s32.totalorder %s121, %s123
      %p130 = scmp.eq.s32.totalorder %s22, 1
      %p131 = por %p129, %p130
      %p132 = scmp.ne.s32.totalorder %s123, %s124
      %p133 = scmp.eq.s32.totalorder %s22, 0
      %p134 = por %p132, %p133
      %p135 = scmp.ne.s32.totalorder %s123, %s124
      %p136 = scmp.eq.s32.totalorder %s23, 1
      %p137 = por %p135, %p136
      %p139 = scmp.ne.s32.totalorder %s124, %s138
      %p140 = scmp.eq.s32.totalorder %s23, 0
      %p141 = por %p139, %p140
      %s143 = sadd.s32 %s142, 1
      %p146 = scmp.eq.s32.totalorder %s17, 1
      %p147 = scmp.ne.s32.totalorder %s142, %s144
      %p148 = scmp.eq.s32.totalorder %s17, 0
      %p149 = por %p147, %p148
      %p150 = scmp.ne.s32.totalorder %s142, %s144
      %p151 = scmp.eq.s32.totalorder %s22, 1
      %p152 = por %p150, %p151
      %p153 = scmp.ne.s32.totalorder %s144, %s145
      %p154 = scmp.eq.s32.totalorder %s22, 0
      %p155 = por %p153, %p154
      %p156 = scmp.ne.s32.totalorder %s144, %s145
      %p157 = scmp.eq.s32.totalorder %s23, 1
      %p158 = por %p156, %p157
      %p160 = scmp.ne.s32.totalorder %s145, %s159
      %p161 = scmp.eq.s32.totalorder %s23, 0
      %p162 = por %p160, %p161
      %s163 = ssub.s32 %s24, %s36
      %s164 = ssub.s32 %s25, %s32
      %s165 = sor.u32 %s163, %s164
      %p166 = scmp.eq.s32.totalorder %s165, 0
      %s168 = sadd.s32 %s167, 1
      %s169 = scalar_select %p166, %s167, %s168
      %p172 = pneg %p166
      %p173 = scmp.eq.s32.totalorder %s17, 1
      %p174 = por %p172, %p173
      %p175 = scmp.ne.s32.totalorder %s167, %s170
      %p176 = scmp.eq.s32.totalorder %s17, 0
      %p177 = por %p175, %p176
      %p178 = scmp.ne.s32.totalorder %s167, %s170
      %p179 = scmp.eq.s32.totalorder %s22, 1
      %p180 = por %p178, %p179
      %p181 = scmp.ne.s32.totalorder %s170, %s171
      %p182 = scmp.eq.s32.totalorder %s22, 0
      %p183 = por %p181, %p182
      %p184 = scmp.ne.s32.totalorder %s170, %s171
      %p185 = scmp.eq.s32.totalorder %s23, 1
      %p186 = por %p184, %p185
      %p188 = scmp.ne.s32.totalorder %s171, %s187
      %p189 = scmp.eq.s32.totalorder %s23, 0
      %p190 = por %p188, %p189
      %p191 = scmp.le.s32.totalorder 1, %s17
      %p192 = scmp.lt.s32.totalorder %s17, 3
      %p193 = pnand %p191, %p192
      %p194 = pneg %p193
      // Predicated region
      $region9: #{tpu_custom_call.1} parent=5 // pred_check
        _
      $region10: #{tpu_custom_call.1} parent=5 // pred_check_branch
        %196 = sbr.rel (%p193) target = $region12
      $region11: #{tpu_custom_call.1} parent=5 // pred_region
        %s197 = ssub.s32 %s17, 1
        // Predicated region
        $region13: #{tpu_custom_call.1} parent=11 // pred_check
          %p198 = pneg %p134
        $region14: #{tpu_custom_call.1} parent=11 // pred_check_branch
          %200 = sbr.rel (%p198) target = $region16
        $region15: #{tpu_custom_call.1} parent=11 // pred_region
          _
        $region16: #{tpu_custom_call.1} parent=11 // pred_fallthru
          _
        // Predicated region
        $region17: #{tpu_custom_call.1} parent=11 // pred_check
          %p201 = pneg %p155
        $region18: #{tpu_custom_call.1} parent=11 // pred_check_branch
          %203 = sbr.rel (%p201) target = $region20
        $region19: #{tpu_custom_call.1} parent=11 // pred_region
          _
        $region20: #{tpu_custom_call.1} parent=11 // pred_fallthru
          _
      $region12: #{tpu_custom_call.1} parent=5 // pred_fallthru
        _
      %p204 = scmp.lt.s32.totalorder %s17, 2
      // Predicated region
      $region21: #{tpu_custom_call.1} parent=5 // pred_check
        %p205 = pneg %p204
      $region22: #{tpu_custom_call.1} parent=5 // pred_check_branch
        %207 = sbr.rel (%p205) target = $region24
      $region23: #{tpu_custom_call.1} parent=5 // pred_region
        // Predicated region
        $region25: #{tpu_custom_call.1} parent=23 // pred_check
          %p208 = pneg %p51
        $region26: #{tpu_custom_call.1} parent=23 // pred_check_branch
          %210 = sbr.rel (%p208) target = $region28
        $region27: #{tpu_custom_call.1} parent=23 // pred_region
          %p211 = scmp.lt.s32.totalorder %s24, 1
          %s212 = scalar_select %p211, %s24, 1
          %p213 = scmp.lt.s32.totalorder %s25, 0
          %s214 = scalar_select %p213, %s25, 0
          %s215 = sadd.s32 %s214, %s212
          %s216 = smul.addr %s215, 4
          %s217 = scalar_lea.vmem %s0, %s216
        $region28: #{tpu_custom_call.1} parent=23 // pred_fallthru
          _
        // Predicated region
        $region29: #{tpu_custom_call.1} parent=23 // pred_check
          %p218 = pneg %p79
        $region30: #{tpu_custom_call.1} parent=23 // pred_check_branch
          %220 = sbr.rel (%p218) target = $region32
        $region31: #{tpu_custom_call.1} parent=23 // pred_region
          %s221 = sand.u32 %s69, 1
          %s222 = scalar_lea.sflag [#allocation3], %s221
          %s223 = sand.u32 %s69, 1
          %s224 = smul.addr %s223, 4
          %s225 = scalar_lea.vmem [#allocation2], %s224
          %s227 = ssub.s32 64, 64
          %228 = vsyncadd %s222, %s227
          %s229 = sadd.s32 %s25, %s24
          %s230 = smul.addr %s229, 64
          %s231 = scalar_lea.hbm %s1, %s230
          %s233 = sshll.u32 %s225, 4
          %s234 = int_to_ptr.vmem [resolvable:$true] %s233
          %236 = dma.hbm_to_vmem [thread:$0]  %s231, 64, %s234, %s222
        $region32: #{tpu_custom_call.1} parent=23 // pred_fallthru
          _
        // Predicated region
        $region33: #{tpu_custom_call.1} parent=23 // pred_check
          %p237 = pneg %p107
        $region34: #{tpu_custom_call.1} parent=23 // pred_check_branch
          %239 = sbr.rel (%p237) target = $region36
        $region35: #{tpu_custom_call.1} parent=23 // pred_region
          %p240 = scmp.lt.s32.totalorder %s24, 1
          %s241 = scalar_select %p240, %s24, 1
          %p242 = scmp.lt.s32.totalorder %s25, 0
          %s243 = scalar_select %p242, %s25, 0
          %s244 = sadd.s32 %s243, %s241
          %s245 = smul.addr %s244, 4
          %s246 = scalar_lea.vmem %s2, %s245
        $region36: #{tpu_custom_call.1} parent=23 // pred_fallthru
          _
      $region24: #{tpu_custom_call.1} parent=5 // pred_fallthru
        _
      %p247 = scmp.le.s32.totalorder 1, %s17
      %p248 = scmp.lt.s32.totalorder %s17, 3
      %p249 = pnand %p247, %p248
      %p250 = pneg %p249
      // Predicated region
      $region37: #{tpu_custom_call.1} parent=5 // pred_check
        _
      $region38: #{tpu_custom_call.1} parent=5 // pred_check_branch
        %252 = sbr.rel (%p249) target = $region40
      $region39: #{tpu_custom_call.1} parent=5 // pred_region
        %s253 = ssub.s32 %s17, 1
        %s254 = sand.u32 %s72, 1
        %s255 = scalar_lea.sflag [#allocation3], %s254
        %s256 = sand.u32 %s72, 1
        %s257 = smul.addr %s256, 4
        %s258 = scalar_lea.vmem [#allocation2], %s257
        // Predicated region
        $region41: #{tpu_custom_call.1} parent=39 // pred_check
          %p259 = pneg %p85
        $region42: #{tpu_custom_call.1} parent=39 // pred_check_branch
          %261 = sbr.rel (%p259) target = $region44
        $region43: #{tpu_custom_call.1} parent=39 // pred_region
          %262 = dma.done %s255, 64
        $region44: #{tpu_custom_call.1} parent=39 // pred_fallthru
          _
        %p263 = scmp.lt.s32.totalorder %s26, 1
        %s264 = scalar_select %p263, %s26, 1
        %p265 = scmp.lt.s32.totalorder %s27, 0
        %s266 = scalar_select %p265, %s27, 0
        %s267 = sadd.s32 %s266, %s264
        %s268 = smul.addr %s267, 4
        %s269 = scalar_lea.vmem %s0, %s268
        %p270 = pneg %p57
        %p271 = pneg %p54
        %s272 = sand.u32 %s72, 1
        %s273 = scalar_lea.sflag [#allocation3], %s272
        %s274 = sand.u32 %s72, 1
        %s275 = smul.addr %s274, 4
        %s276 = scalar_lea.vmem [#allocation2], %s275
        %p277 = pneg %p85
        %p278 = pneg %p82
        %p279 = scmp.lt.s32.totalorder %s26, 1
        %s280 = scalar_select %p279, %s26, 1
        %p281 = scmp.lt.s32.totalorder %s27, 0
        %s282 = scalar_select %p281, %s27, 0
        %s283 = sadd.s32 %s282, %s280
        %s284 = smul.addr %s283, 4
        %s285 = scalar_lea.vmem %s2, %s284
        %p286 = pneg %p113
        %p287 = pneg %p110
        %p288 = pneg %p134
        %p289 = pneg %p131
        %p290 = pneg %p155
        %p291 = pneg %p152
        %p292 = pneg %p183
        %p293 = pneg %p180
        %s294 = sand.u32 %s170, 1
        %s295 = scalar_lea.sflag [#allocation4], %s294
        %s296 = sand.u32 %s170, 1
        %s297 = smul.addr %s296, 4
        %s298 = scalar_lea.vmem [#allocation5], %s297
        %p299 = scmp.lt.s32.totalorder %s26, 1
        %s300 = scalar_select %p299, %s26, 1
        %p301 = scmp.lt.s32.totalorder %s27, 0
        %s302 = scalar_select %p301, %s27, 0
        %s303 = sadd.s32 %s302, %s300
        %s304 = smul.addr %s303, 4
        %s305 = scalar_lea.vmem %s0, %s304
        %p306 = scmp.lt.s32.totalorder %s26, 1
        %s307 = scalar_select %p306, %s26, 1
        %p308 = scmp.lt.s32.totalorder %s27, 0
        %s309 = scalar_select %p308, %s27, 0
        %s310 = sadd.s32 %s309, %s307
        %s311 = smul.addr %s310, 4
        %s312 = scalar_lea.vmem %s2, %s311
        %v313 = vld [vmem:[%s305] sm:$0xf]
        %v314 = vld [vmem:[%s258] sm:$0xf]
        %vm315 = vcmask 1047616
        %316 = vrot.lane.b32.xlu0 %v314, 8
        %v317 = vpop.permute.xlu0 %316
        %v318 = vsel %vm315, %v317, %v314
        %319 = vrot.lane.b32.xlu0 %v318, 8
        %v320 = vpop.permute.xlu0 %319
        %v321 = vsel %vm315, %v320, %v314
        %v322 = vlaneseq
        %v323 = vand.u32 %v322, 127
        %vm324 = vcmp.eq.s32.totalorder %v323, 0
        %v325 = vld [vmem:[%s312] sm:$0xf]
        %v326 = vsel %vm324, 1, 0
        %vm327 = vcmp.eq.s32.totalorder %v326, 1
        %329 = vset.pattern.permute.xlu0 0
        %330 = vperm.xlu0 %329, %v325
        %v331 = vpop.permute.xlu0 %330
        %334 = vrot.lane.b32.xlu0 %v321, 121
        %v335 = vpop.permute.xlu0 %334
        %v337 = vsel %vm327, %v331, %v335
        %v338 = vld [vmem:[%s3] sm:$0xf]
        %s339 = scalar_lea.vmem %s3, 4
        %v340 = vld [vmem:[%s339] sm:$0xf]
        %vm341 = vcmask 31744
        %v343 = vsel %vm341, %v340, 0
        %vm345 = vcmask 1043456
        %v347 = vsel %vm345, %v313, 0
        %349 = vmatprep.subr.mxu0 0.0
        %350 = vmatpush1.msra.mxu0 %v347
        %351 = vmatprep.subr.mxu0 0.0
        %352 = vmatpush1.msra.mxu0 0.0
        %353 = vmatprep.subr.mxu0 0.0
        %354 = vmatpush1.msra.mxu0 0.0
        %355 = vmatprep.subr.mxu0 0.0
        %356 = vmatpush1.msra.mxu0 0.0
        %357 = vmatprep.subr.mxu0 0.0
        %358 = vmatpush1.msra.mxu0 0.0
        %359 = vmatprep.subr.mxu0 0.0
        %360 = vmatpush1.msra.mxu0 0.0
        %361 = vmatprep.subr.mxu0 0.0
        %362 = vmatpush1.msra.mxu0 0.0
        %363 = vmatprep.subr.mxu0 0.0
        %364 = vmatpush1.msra.mxu0 0.0
        %365 = vmatprep.subr.mxu0 0.0
        %366 = vmatpush1.msra.mxu0 0.0
        %367 = vmatprep.subr.mxu0 0.0
        %368 = vmatpush1.msra.mxu0 0.0
        %369 = vmatprep.subr.mxu0 0.0
        %370 = vmatpush1.msra.mxu0 0.0
        %371 = vmatprep.subr.mxu0 0.0
        %372 = vmatpush1.msra.mxu0 0.0
        %373 = vmatprep.subr.mxu0 0.0
        %374 = vmatpush1.msra.mxu0 0.0
        %375 = vmatprep.subr.mxu0 0.0
        %376 = vmatpush1.msra.mxu0 0.0
        %377 = vmatprep.subr.mxu0 0.0
        %378 = vmatpush1.msra.mxu0 0.0
        %379 = vmatprep.subr.mxu0 0.0
        %380 = vmatpush1.msra.mxu0 0.0
        %381 = vmatprep.subr.mxu0 0.0
        %382 = vmatpush1.msra.mxu0 0.0
        %383 = vmatprep.subr.mxu0 0.0
        %384 = vmatpush1.msra.mxu0 0.0
        %385 = vmatprep.subr.mxu0 0.0
        %386 = vmatpush1.msra.mxu0 0.0
        %387 = vmatprep.subr.mxu0 0.0
        %388 = vmatpush1.msra.mxu0 0.0
        %389 = vmatprep.subr.mxu0 0.0
        %390 = vmatpush1.msra.mxu0 0.0
        %391 = vmatprep.subr.mxu0 0.0
        %392 = vmatpush1.msra.mxu0 0.0
        %393 = vmatprep.subr.mxu0 0.0
        %394 = vmatpush1.msra.mxu0 0.0
        %395 = vmatprep.subr.mxu0 0.0
        %396 = vmatpush1.msra.mxu0 0.0
        %397 = vmatprep.subr.mxu0 0.0
        %398 = vmatpush1.msra.mxu0 0.0
        %399 = vmatprep.subr.mxu0 0.0
        %400 = vmatpush1.msra.mxu0 0.0
        %401 = vmatprep.subr.mxu0 0.0
        %402 = vmatpush1.msra.mxu0 0.0
        %403 = vmatprep.subr.mxu0 0.0
        %404 = vmatpush1.msra.mxu0 0.0
        %405 = vmatprep.subr.mxu0 0.0
        %406 = vmatpush1.msra.mxu0 0.0
        %407 = vmatprep.subr.mxu0 0.0
        %408 = vmatpush1.msra.mxu0 0.0
        %409 = vmatprep.subr.mxu0 0.0
        %410 = vmatpush1.msra.mxu0 0.0
        %411 = vmatprep.subr.mxu0 0.0
        %412 = vmatpush1.msra.mxu0 0.0
        %413 = vmatprep.mubr.f32.mxu0 0.0
        %414 = vmatmul.mubr.f32.gmra.mrb[0].mxu0 %v343
        %v415 = vpop.f32.mrb[0].mxu0
        %v416 = vadd.f32 0.0, %v415
        %v417 = vpop.f32.mrb[0].mxu0
        %418 = vdwg.mxu0
        %v420 = vsel %vm341, %v338, 0
        %v423 = vsel %vm345, %v337, 0
        %425 = vmatprep.subr.mxu0 0.0
        %426 = vmatpush1.msra.mxu0 %v423
        %427 = vmatprep.subr.mxu0 0.0
        %428 = vmatpush1.msra.mxu0 0.0
        %429 = vmatprep.subr.mxu0 0.0
        %430 = vmatpush1.msra.mxu0 0.0
        %431 = vmatprep.subr.mxu0 0.0
        %432 = vmatpush1.msra.mxu0 0.0
        %433 = vmatprep.subr.mxu0 0.0
        %434 = vmatpush1.msra.mxu0 0.0
        %435 = vmatprep.subr.mxu0 0.0
        %436 = vmatpush1.msra.mxu0 0.0
        %437 = vmatprep.subr.mxu0 0.0
        %438 = vmatpush1.msra.mxu0 0.0
        %439 = vmatprep.subr.mxu0 0.0
        %440 = vmatpush1.msra.mxu0 0.0
        %441 = vmatprep.subr.mxu0 0.0
        %442 = vmatpush1.msra.mxu0 0.0
        %443 = vmatprep.subr.mxu0 0.0
        %444 = vmatpush1.msra.mxu0 0.0
        %445 = vmatprep.subr.mxu0 0.0
        %446 = vmatpush1.msra.mxu0 0.0
        %447 = vmatprep.subr.mxu0 0.0
        %448 = vmatpush1.msra.mxu0 0.0
        %449 = vmatprep.subr.mxu0 0.0
        %450 = vmatpush1.msra.mxu0 0.0
        %451 = vmatprep.subr.mxu0 0.0
        %452 = vmatpush1.msra.mxu0 0.0
        %453 = vmatprep.subr.mxu0 0.0
        %454 = vmatpush1.msra.mxu0 0.0
        %455 = vmatprep.subr.mxu0 0.0
        %456 = vmatpush1.msra.mxu0 0.0
        %457 = vmatprep.subr.mxu0 0.0
        %458 = vmatpush1.msra.mxu0 0.0
        %459 = vmatprep.subr.mxu0 0.0
        %460 = vmatpush1.msra.mxu0 0.0
        %461 = vmatprep.subr.mxu0 0.0
        %462 = vmatpush1.msra.mxu0 0.0
        %463 = vmatprep.subr.mxu0 0.0
        %464 = vmatpush1.msra.mxu0 0.0
        %465 = vmatprep.subr.mxu0 0.0
        %466 = vmatpush1.msra.mxu0 0.0
        %467 = vmatprep.subr.mxu0 0.0
        %468 = vmatpush1.msra.mxu0 0.0
        %469 = vmatprep.subr.mxu0 0.0
        %470 = vmatpush1.msra.mxu0 0.0
        %471 = vmatprep.subr.mxu0 0.0
        %472 = vmatpush1.msra.mxu0 0.0
        %473 = vmatprep.subr.mxu0 0.0
        %474 = vmatpush1.msra.mxu0 0.0
        %475 = vmatprep.subr.mxu0 0.0
        %476 = vmatpush1.msra.mxu0 0.0
        %477 = vmatprep.subr.mxu0 0.0
        %478 = vmatpush1.msra.mxu0 0.0
        %479 = vmatprep.subr.mxu0 0.0
        %480 = vmatpush1.msra.mxu0 0.0
        %481 = vmatprep.subr.mxu0 0.0
        %482 = vmatpush1.msra.mxu0 0.0
        %483 = vmatprep.subr.mxu0 0.0
        %484 = vmatpush1.msra.mxu0 0.0
        %485 = vmatprep.subr.mxu0 0.0
        %486 = vmatpush1.msra.mxu0 0.0
        %487 = vmatprep.subr.mxu0 0.0
        %488 = vmatpush1.msra.mxu0 0.0
        %489 = vmatprep.mubr.f32.mxu0 0.0
        %490 = vmatmul.mubr.f32.gmra.mrb[0].mxu0 %v420
        %v491 = vpop.f32.mrb[0].mxu0
        %v492 = vadd.f32 %v416, %v491
        %v493 = vpop.f32.mrb[0].mxu0
        %494 = vdwg.mxu0
        %s495 = scalar_lea.vmem %s3, 8
        %v496 = vld [vmem:[%s495] sm:$0xf]
        %v498 = vsel %vm341, %v496, 0
        %v501 = vsel %vm345, %v314, 0
        %503 = vmatprep.subr.mxu0 0.0
        %504 = vmatpush1.msra.mxu0 %v501
        %505 = vmatprep.subr.mxu0 0.0
        %506 = vmatpush1.msra.mxu0 0.0
        %507 = vmatprep.subr.mxu0 0.0
        %508 = vmatpush1.msra.mxu0 0.0
        %509 = vmatprep.subr.mxu0 0.0
        %510 = vmatpush1.msra.mxu0 0.0
        %511 = vmatprep.subr.mxu0 0.0
        %512 = vmatpush1.msra.mxu0 0.0
        %513 = vmatprep.subr.mxu0 0.0
        %514 = vmatpush1.msra.mxu0 0.0
        %515 = vmatprep.subr.mxu0 0.0
        %516 = vmatpush1.msra.mxu0 0.0
        %517 = vmatprep.subr.mxu0 0.0
        %518 = vmatpush1.msra.mxu0 0.0
        %519 = vmatprep.subr.mxu0 0.0
        %520 = vmatpush1.msra.mxu0 0.0
        %521 = vmatprep.subr.mxu0 0.0
        %522 = vmatpush1.msra.mxu0 0.0
        %523 = vmatprep.subr.mxu0 0.0
        %524 = vmatpush1.msra.mxu0 0.0
        %525 = vmatprep.subr.mxu0 0.0
        %526 = vmatpush1.msra.mxu0 0.0
        %527 = vmatprep.subr.mxu0 0.0
        %528 = vmatpush1.msra.mxu0 0.0
        %529 = vmatprep.subr.mxu0 0.0
        %530 = vmatpush1.msra.mxu0 0.0
        %531 = vmatprep.subr.mxu0 0.0
        %532 = vmatpush1.msra.mxu0 0.0
        %533 = vmatprep.subr.mxu0 0.0
        %534 = vmatpush1.msra.mxu0 0.0
        %535 = vmatprep.subr.mxu0 0.0
        %536 = vmatpush1.msra.mxu0 0.0
        %537 = vmatprep.subr.mxu0 0.0
        %538 = vmatpush1.msra.mxu0 0.0
        %539 = vmatprep.subr.mxu0 0.0
        %540 = vmatpush1.msra.mxu0 0.0
        %541 = vmatprep.subr.mxu0 0.0
        %542 = vmatpush1.msra.mxu0 0.0
        %543 = vmatprep.subr.mxu0 0.0
        %544 = vmatpush1.msra.mxu0 0.0
        %545 = vmatprep.subr.mxu0 0.0
        %546 = vmatpush1.msra.mxu0 0.0
        %547 = vmatprep.subr.mxu0 0.0
        %548 = vmatpush1.msra.mxu0 0.0
        %549 = vmatprep.subr.mxu0 0.0
        %550 = vmatpush1.msra.mxu0 0.0
        %551 = vmatprep.subr.mxu0 0.0
        %552 = vmatpush1.msra.mxu0 0.0
        %553 = vmatprep.subr.mxu0 0.0
        %554 = vmatpush1.msra.mxu0 0.0
        %555 = vmatprep.subr.mxu0 0.0
        %556 = vmatpush1.msra.mxu0 0.0
        %557 = vmatprep.subr.mxu0 0.0
        %558 = vmatpush1.msra.mxu0 0.0
        %559 = vmatprep.subr.mxu0 0.0
        %560 = vmatpush1.msra.mxu0 0.0
        %561 = vmatprep.subr.mxu0 0.0
        %562 = vmatpush1.msra.mxu0 0.0
        %563 = vmatprep.subr.mxu0 0.0
        %564 = vmatpush1.msra.mxu0 0.0
        %565 = vmatprep.subr.mxu0 0.0
        %566 = vmatpush1.msra.mxu0 0.0
        %567 = vmatprep.mubr.f32.mxu0 0.0
        %568 = vmatmul.mubr.f32.gmra.mrb[0].mxu0 %v498
        %v569 = vpop.f32.mrb[0].mxu0
        %v570 = vadd.f32 0.0, %v569
        %v571 = vpop.f32.mrb[0].mxu0
        %572 = vdwg.mxu0
        %v573 = vadd.f32 %v492, %v570
        %v574 = vld [vmem:[%s4] sm:$0xf]
        %576 = vset.pattern.permute.xlu0 0
        %577 = vperm.xlu0 %576, %v574
        %v578 = vpop.permute.xlu0 %577
        %v580 = vadd.f32 %v573, %v578
        %vm581 = vcmask 60416
        %582 = vst.msk [vmem:[%s298] sm:$0xf] %vm581, %v580
        %s583 = sand.u32 %s170, 1
        %s584 = scalar_lea.sflag [#allocation4], %s583
        %s585 = sand.u32 %s170, 1
        %s586 = smul.addr %s585, 4
        %s587 = scalar_lea.vmem [#allocation5], %s586
        // Predicated region
        $region45: #{tpu_custom_call.1} parent=39 // pred_check
          %p588 = pneg %p180
        $region46: #{tpu_custom_call.1} parent=39 // pred_check_branch
          %590 = sbr.rel (%p588) target = $region48
        $region47: #{tpu_custom_call.1} parent=39 // pred_region
          %s592 = ssub.s32 64, 64
          %593 = vsyncadd %s584, %s592
          %s594 = sadd.s32 %s27, %s26
          %s595 = smul.addr %s594, 64
          %s596 = scalar_lea.hbm %s5, %s595
          %s598 = sshll.u32 %s587, 4
          %s599 = int_to_ptr.vmem [resolvable:$true] %s598
          %601 = dma.vmem_to_hbm [thread:$0]  %s599, 64, %s596, %s584
        $region48: #{tpu_custom_call.1} parent=39 // pred_fallthru
          _
      $region40: #{tpu_custom_call.1} parent=5 // pred_fallthru
        _
      %p602 = scmp.le.s32.totalorder 2, %s17
      // Predicated region
      $region49: #{tpu_custom_call.1} parent=5 // pred_check
        %p603 = pneg %p602
      $region50: #{tpu_custom_call.1} parent=5 // pred_check_branch
        %605 = sbr.rel (%p603) target = $region52
      $region51: #{tpu_custom_call.1} parent=5 // pred_region
        %s606 = ssub.s32 %s17, 2
        // Predicated region
        $region53: #{tpu_custom_call.1} parent=51 // pred_check
          %p607 = pneg %p186
        $region54: #{tpu_custom_call.1} parent=51 // pred_check_branch
          %609 = sbr.rel (%p607) target = $region56
        $region55: #{tpu_custom_call.1} parent=51 // pred_region
          %s610 = sand.u32 %s171, 1
          %s611 = scalar_lea.sflag [#allocation4], %s610
          %s612 = sand.u32 %s171, 1
          %s613 = smul.addr %s612, 4
          %s614 = scalar_lea.vmem [#allocation5], %s613
          %615 = dma.done %s611, 64
        $region56: #{tpu_custom_call.1} parent=51 // pred_fallthru
          _
      $region52: #{tpu_custom_call.1} parent=5 // pred_fallthru
        _
    $region6: #{tpu_custom_call.1} parent=1 // loop_footer
      %s21 = sadd.s32 1, %s17
    $region7: #{tpu_custom_call.1} parent=1 // loop_footer_branch
      %16 = sbr.rel target = $region3
    $region8: #{tpu_custom_call.1} parent=1 // loop_exit
      _
    %616 = vsyncpa [#allocation3], 1
    %s617 = scalar_lea.sflag [#allocation3], 1
    %618 = vsyncpa %s617, 1
    %619 = vsyncpa [#allocation4], 1
    %s620 = scalar_lea.sflag [#allocation4], 1
    %621 = vsyncpa %s620, 1

</llo_original>
